<compile_context>
chip_gen: v7x
topology: tpu7x:2x2x1
jax: 0.10.0
libtpu: 0.0.40
codegen_flags: <defaults>
</compile_context>

<pallas_src>
import math

import jax
import jax.numpy as jnp
from jax.experimental import pallas as pl
from jax.experimental.pallas import tpu as pltpu


def _sublane_pack(itemsize: int) -> int:
    # Sublane packing: f32 -> 8, bf16/f16 -> 16, int8/fp8 -> 32.
    return {4: 8, 2: 16, 1: 32}.get(itemsize, 8)


_MIN_CHUNK_BYTES = 1 * 1024 * 1024   # don't bother chunking tiny tensors
_MAX_INFLIGHT = 4                    # DMA semaphores / copies in flight


def _make_hbm_copy_kernel(num_chunks: int, chunk_rows: int, nsem: int):
    """HBM->HBM streaming copy: `num_chunks` DMAs, `nsem` kept in flight."""

    def kernel(x_ref, o_ref, sems):
        if num_chunks == 1:
            # Single whole-buffer DMA (always safe, always tile-aligned).
            cp = pltpu.make_async_copy(x_ref, o_ref, sems.at[0])
            cp.start()
            cp.wait()
            return

        def dma(c):
            r0 = c * chunk_rows
            return pltpu.make_async_copy(
                x_ref.at[pl.ds(r0, chunk_rows)],
                o_ref.at[pl.ds(r0, chunk_rows)],
                sems.at[c % nsem],
            )

        # Prime `nsem` copies, then retire/issue in a ring so the DMA queues
        # stay full.  num_chunks is small and static -> plain Python unroll.
        for c in range(nsem):
            dma(c).start()
        for c in range(num_chunks):
            dma(c).wait()
            nxt = c + nsem
            if nxt < num_chunks:
                dma(nxt).start()

    return kernel


def flatten_layer(x: jax.Array) -> jax.Array:
    """Pallas equivalent of FlattenLayer.forward: (N, ...) -> (N, prod(...))."""
    n = x.shape[0]
    d = math.prod(x.shape[1:]) if x.ndim > 1 else 1
    itemsize = jnp.dtype(x.dtype).itemsize
    sub = _sublane_pack(itemsize)

    # Metadata-only, row-major reshape (== torch .view on contiguous input).
    x2d = jnp.reshape(x, (n, d))

    # ---- chunk plan: exact divisor of n, sublane-aligned, >= 1 MiB ---------
    # (Keeps chunk boundaries on (sub,128) layout-tile boundaries and avoids
    # any ragged tail; small inputs collapse to one whole-buffer DMA.)
    row_bytes = d * itemsize
    num_chunks = 1
    for cand in (8, 4, 2):
        cr = n // cand
        if n % cand == 0 and cr % sub == 0 and cr * row_bytes >= _MIN_CHUNK_BYTES:
            num_chunks = cand
            break
    chunk_rows = n // num_chunks
    nsem = min(_MAX_INFLIGHT, num_chunks)

    out = pl.pallas_call(
        _make_hbm_copy_kernel(num_chunks, chunk_rows, nsem),
        out_shape=jax.ShapeDtypeStruct((n, d), x.dtype),
        in_specs=[pl.BlockSpec(memory_space=pl.ANY)],   # raw HBM ref, no auto-DMA
        out_specs=pl.BlockSpec(memory_space=pl.ANY),    # raw HBM ref, no auto-DMA
        scratch_shapes=[pltpu.SemaphoreType.DMA((nsem,))],
        cost_estimate=pl.CostEstimate(
            flops=0,
            transcendentals=0,
            bytes_accessed=2 * n * d * itemsize,
        ),
    )(x2d)
    return out


if __name__ == "__main__":
    key = jax.random.PRNGKey(0)
    # Small NCHW input consistent with a typical conv feature map:
    # batch=2, channels=4, spatial=16x16  ->  flattened feature dim = 1024.
    x = jax.random.normal(key, (2, 4, 16, 16), dtype=jnp.float32)

    flatten_fn = jax.jit(flatten_layer)
    y = flatten_fn(x)
    y = jax.block_until_ready(y)

    # Correctness check vs. pure-JAX reference (== torch .view semantics).
    y_ref = jnp.reshape(x, (x.shape[0], -1))
    assert y.shape == (2, 4 * 16 * 16), y.shape
    assert y.dtype == x.dtype
    assert bool(jnp.array_equal(y, y_ref))

    print("KERNEL_OK")
</pallas_src>

<mosaic_0001>
module attributes {stable_mosaic.version = 11 : i64} {
  func.func @kernel(%arg0: memref<2x1024xf32, #tpu.memory_space<any>>, %arg1: memref<2x1024xf32, #tpu.memory_space<any>>, %arg2: memref<1x!tpu.dma_semaphore, #tpu.memory_space<semaphore_mem>>) attributes {dimension_semantics = [], scalar_prefetch = 0 : i64, scratch_operands = 1 : i64, tpu.core_type = #tpu.core_type<tc>} {
    %c0_i32 = arith.constant 0 : i32
    %0 = tpu.memref_slice %arg2[%c0_i32] : memref<1x!tpu.dma_semaphore, #tpu.memory_space<semaphore_mem>> -> memref<1x!tpu.dma_semaphore, #tpu.memory_space<semaphore_mem>>
    %1 = tpu.memref_squeeze %0 : memref<1x!tpu.dma_semaphore, #tpu.memory_space<semaphore_mem>> -> memref<!tpu.dma_semaphore, #tpu.memory_space<semaphore_mem>>
    tpu.enqueue_dma source(%arg0 : memref<2x1024xf32, #tpu.memory_space<any>>) target(%arg1 : memref<2x1024xf32, #tpu.memory_space<any>>) target_semaphore(%1 : memref<!tpu.dma_semaphore, #tpu.memory_space<semaphore_mem>>)
    %c0_i32_0 = arith.constant 0 : i32
    %2 = tpu.memref_slice %arg2[%c0_i32_0] : memref<1x!tpu.dma_semaphore, #tpu.memory_space<semaphore_mem>> -> memref<1x!tpu.dma_semaphore, #tpu.memory_space<semaphore_mem>>
    %3 = tpu.memref_squeeze %2 : memref<1x!tpu.dma_semaphore, #tpu.memory_space<semaphore_mem>> -> memref<!tpu.dma_semaphore, #tpu.memory_space<semaphore_mem>>
    tpu.wait_dma2 semaphore(%3 : memref<!tpu.dma_semaphore, #tpu.memory_space<semaphore_mem>>) src(%arg0 : memref<2x1024xf32, #tpu.memory_space<any>>) dst(%arg1 : memref<2x1024xf32, #tpu.memory_space<any>>)
    return
  }
}

</mosaic_0001>

<llo_original>
// kernel: flatten_layer.1
$region0: #{flatten_layer.1}
  #allocation0 [shape = 'u32[]', space=smem, size = 0x4, offset = 0x4, fixed_abs, tag = 'smem constant byte address 0x4 - core index']
  #allocation1 [shape = 'u32[144,128]{1,0:T(1,128)}', space=vmem, size = 0x12000, scoped, tag = 'internal scratch']
  #allocation2 [shape = 's32[1]{0}', space=sflag, size = 0x4, scoped, tag = 'scratch operand']
  #allocation3 [shape = 's32[]', space=sflag, size = 0x4, offset = 0, fixed_abs, tag = 'sflag constant byte address 0x0 - dummy sync flag']
  #allocation4 [shape = 's32[]', space=sflag, size = 0x4, offset = 0, fixed_abs, tag = 'sflag constant byte address 0x0 - dummy sync flag']
  #allocation5 [shape = 'u32[]', space=smem, size = 0x4, offset = 0x44, fixed_abs, tag = 'smem constant byte address 0x44 - assertion arg 0']
  #allocation6 [shape = 'u32[]', space=smem, size = 0x4, offset = 0x48, fixed_abs, tag = 'smem constant byte address 0x48 - assertion arg 1']
  %s0 = inlined_call_operand.vmem [shape: f32[2,1024], index: 0, kind: input, shape index: {}]
  %s1 = inlined_call_operand.hbm [shape: f32[2,1024], index: 1, kind: output, shape index: {}]
  %s2 = sld [smem:[#allocation0]]
  $region6: #{flatten_layer.1} parent=0
    _
  %s4 = ssub.s32 1, %s2
  %s5 = scalar_select 0, %s4, %s2
  // Predicated region
  $region2: #{flatten_layer.1} parent=0 // pred_check
    _
  $region3: #{flatten_layer.1} parent=0 // pred_check_branch
    %7 = sbr.rel target = $region5
  $region4: #{flatten_layer.1} parent=0 // pred_region
    %8 = sst [smem:[#allocation5]] [#allocation4]
    %9 = sst [smem:[#allocation6]] [#allocation3]
  $region5: #{flatten_layer.1} parent=0 // pred_fallthru
    _
  %11 = shalt.err (0)
  %s13 = sshll.u32 %s0, 4
  %s14 = int_to_ptr.vmem [resolvable:$true] %s13
  %16 = dma.vmem_to_hbm [thread:$0]  %s14, 256, %s1, [#allocation2]
  %s17 = smul.u32 2, 1
  %s18 = smul.u32 %s17, 8
  %s19 = sshll.u32 %s18, 4
  %20 = dma.done [#allocation2], %s19
  %21 = vsyncmov [#allocation2]
  %s22 = vpop.sfrf %21
  %p23 = scmp.eq.s32.totalorder %s22, 0
  %p24 = pneg %p23
  %26 = shalt.err (%p24)

</llo_original>
